<compile_context>
chip_gen: v7x
topology: tpu7x:2x2x1
jax: 0.10.0
libtpu: 0.0.40
codegen_flags: <defaults>
</compile_context>

<pallas_src>
import numpy as np
import jax
import jax.numpy as jnp
from jax import lax
from jax.experimental import pallas as pl
from jax.experimental.pallas import tpu as pltpu


def _pca_kernel(x_ref, dvt_ref, bias_ref, o_ref):
    # x_ref:    (TN, D)      VMEM  (row tile, pipelined)
    # dvt_ref:  (D, C_pad)   VMEM  (resident across grid steps)
    # bias_ref: (1, C_pad)   VMEM  (mean @ DVt, resident)
    # o_ref:    (TN, C_pad)  VMEM
    y = jnp.dot(x_ref[...], dvt_ref[...],
                preferred_element_type=jnp.float32)        # MXU matmul
    y = y - bias_ref[...]                                  # == (x - mean) @ DVt
    sq = jnp.sum(y * y, axis=-1, keepdims=True)            # (TN, 1)
    inv = lax.rsqrt(jnp.maximum(sq, 1e-24))                # 1 / max(||y||, 1e-12)
    o_ref[...] = (y * inv).astype(o_ref.dtype)


def pca_forward(x, mean, dvt, *, tile_rows=512, matmul_dtype=None):
    """x: (..., D); mean: (D,); dvt: (D, C). Returns (..., C) float32.

    tile_rows:    rows per grid step (multiple of 8; shrink on v5e/v7x if
                  D is very large and VMEM gets tight).
    matmul_dtype: e.g. jnp.bfloat16 to halve HBM traffic for x / DVt on
                  bf16-native MXUs (accumulation stays f32).
    """
    orig_shape = x.shape
    D = orig_shape[-1]
    C = dvt.shape[-1]

    x2 = x.reshape(-1, D).astype(jnp.float32)
    N = x2.shape[0]

    # Lane-dense output width (multiple of 128); the extra zero columns are
    # inert for both the matmul and the L2 norm.
    C_pad = ((C + 127) // 128) * 128
    dvt_p = jnp.zeros((D, C_pad), jnp.float32).at[:, :C].set(
        dvt.astype(jnp.float32))
    # Fold the mean subtraction: (x - mean) @ DVt == x @ DVt - (mean @ DVt).
    bias = jnp.dot(mean.astype(jnp.float32).reshape(1, D), dvt_p)   # (1, C_pad)

    # Row tile: multiple of 8, capped at tile_rows; pad N up to a whole grid.
    TN = min(tile_rows, ((N + 7) // 8) * 8)
    TN = max(8, (TN // 8) * 8)
    N_pad = ((N + TN - 1) // TN) * TN
    if N_pad != N:
        x2 = jnp.pad(x2, ((0, N_pad - N), (0, 0)))

    if matmul_dtype is not None:
        x_in = x2.astype(matmul_dtype)
        dvt_in = dvt_p.astype(matmul_dtype)
    else:
        x_in, dvt_in = x2, dvt_p

    grid = (N_pad // TN,)
    cost = pl.CostEstimate(
        flops=2 * N_pad * D * C_pad,
        transcendentals=N_pad,
        bytes_accessed=(x_in.size * x_in.dtype.itemsize
                        + dvt_in.size * dvt_in.dtype.itemsize
                        + 4 * (C_pad + N_pad * C_pad)),
    )

    out = pl.pallas_call(
        _pca_kernel,
        out_shape=jax.ShapeDtypeStruct((N_pad, C_pad), jnp.float32),
        grid_spec=pltpu.PrefetchScalarGridSpec(
            num_scalar_prefetch=0,
            grid=grid,
            in_specs=[
                pl.BlockSpec((TN, D), lambda i: (i, 0)),      # row tile of x
                pl.BlockSpec((D, C_pad), lambda i: (0, 0)),   # resident DVt
                pl.BlockSpec((1, C_pad), lambda i: (0, 0)),   # resident bias
            ],
            out_specs=pl.BlockSpec((TN, C_pad), lambda i: (i, 0)),
        ),
        compiler_params=pltpu.CompilerParams(
            dimension_semantics=("parallel",)),
        cost_estimate=cost,
    )(x_in, dvt_in, bias)

    out = out[:N, :C]
    return out.reshape(orig_shape[:-1] + (C,))


def make_pca_params(D, n_components, eps=1e-7, seed=0):
    """Deterministically build `mean` and `DVt` the way PCALayer.init_params /
    train_pca would (from a synthetic training set)."""
    rng = np.random.RandomState(seed)
    trainset = rng.randn(64, D).astype(np.float64)
    mean = trainset.mean(axis=0)
    centered = trainset - mean
    Xcov = centered.T @ centered
    d, V = np.linalg.eigh(Xcov)
    idx = np.argsort(d)[::-1][:n_components]
    d = d[idx]
    V = V[:, idx]
    Dm = np.diag(1.0 / np.sqrt(d + eps))
    DVt = (Dm @ V.T).T.astype(np.float32)          # shape (D, n_components)
    return jnp.asarray(mean.astype(np.float32)), jnp.asarray(DVt)


if __name__ == "__main__":
    # Small shapes consistent with the module: (batch, seq, feature_dim).
    B, S, D = 2, 8, 32
    n_components = 16

    mean, dvt = make_pca_params(D, n_components, seed=0)

    key = jax.random.PRNGKey(0)
    x = jax.random.normal(key, (B, S, D), dtype=jnp.float32)

    out = pca_forward(x, mean, dvt)
    out = jax.block_until_ready(out)

    # Reference check in plain JAX (module order: subtract-then-matmul).
    xr = x - mean[None, None, :]
    yr = xr @ dvt
    ref = yr / jnp.maximum(
        jnp.sqrt(jnp.sum(yr * yr, axis=-1, keepdims=True)), 1e-12)
    np.testing.assert_allclose(np.asarray(out), np.asarray(ref),
                               rtol=1e-4, atol=1e-4)
    assert out.shape == (B, S, n_components)

    print("KERNEL_OK")
</pallas_src>

<mosaic_0001>
module attributes {stable_mosaic.version = 11 : i64} {
  func.func @_pca_kernel(%arg0: i32, %arg1: memref<16x32xf32, #tpu.memory_space<vmem>>, %arg2: memref<32x128xf32, #tpu.memory_space<vmem>>, %arg3: memref<1x128xf32, #tpu.memory_space<vmem>>, %arg4: memref<16x128xf32, #tpu.memory_space<vmem>>) attributes {dimension_semantics = [#tpu.dimension_semantics<parallel>], iteration_bounds = array<i64: 1>, scalar_prefetch = 0 : i64, scratch_operands = 0 : i64, tpu.core_type = #tpu.core_type<tc>, window_params = [{transform_indices = @transform_0, window_bounds = array<i64: 16, 32>}, {pipeline_mode = #tpu.pipeline_mode<synchronous>, transform_indices = @transform_1, window_bounds = array<i64: 32, 128>}, {pipeline_mode = #tpu.pipeline_mode<synchronous>, transform_indices = @transform_2, window_bounds = array<i64: 1, 128>}, {transform_indices = @transform_3, window_bounds = array<i64: 16, 128>}]} {
    %c0 = arith.constant 0 : index
    %c0_0 = arith.constant 0 : index
    %0 = vector.load %arg1[%c0, %c0_0] : memref<16x32xf32, #tpu.memory_space<vmem>>, vector<16x32xf32>
    %c0_1 = arith.constant 0 : index
    %c0_2 = arith.constant 0 : index
    %1 = vector.load %arg2[%c0_1, %c0_2] : memref<32x128xf32, #tpu.memory_space<vmem>>, vector<32x128xf32>
    %cst = arith.constant dense<0.000000e+00> : vector<16x128xf32>
    %2 = tpu.matmul %0, %1, %cst {dimension_numbers = #tpu.dot_dimension_numbers<[1], [0], [0], [1], [0, 0, 1, 1], [], []>} : vector<16x32xf32>, vector<32x128xf32>, vector<16x128xf32> -> vector<16x128xf32>
    %c0_3 = arith.constant 0 : index
    %c0_4 = arith.constant 0 : index
    %3 = vector.load %arg3[%c0_3, %c0_4] : memref<1x128xf32, #tpu.memory_space<vmem>>, vector<1x128xf32>
    %4 = vector.broadcast %3 : vector<1x128xf32> to vector<16x128xf32>
    %5 = arith.subf %2, %4 : vector<16x128xf32>
    %6 = arith.mulf %5, %5 : vector<16x128xf32>
    %cst_5 = arith.constant dense<0.000000e+00> : vector<16xf32>
    %7 = vector.multi_reduction <add>, %6, %cst_5 [1] : vector<16x128xf32> to vector<16xf32>
    %8 = vector.shape_cast %7 : vector<16xf32> to vector<16x1xf32>
    %cst_6 = arith.constant 1.000000e-24 : f32
    %9 = vector.broadcast %cst_6 : f32 to vector<16x1xf32>
    %10 = arith.maximumf %8, %9 : vector<16x1xf32>
    %11 = math.rsqrt %10 : vector<16x1xf32>
    %12 = vector.broadcast %11 : vector<16x1xf32> to vector<16x128xf32>
    %13 = arith.mulf %5, %12 : vector<16x128xf32>
    %c0_7 = arith.constant 0 : index
    %c0_8 = arith.constant 0 : index
    %14 = vector.load %arg4[%c0_7, %c0_8] : memref<16x128xf32, #tpu.memory_space<vmem>>, vector<16x128xf32>
    tpu.vector_store %arg4[%c0_7, %c0_8], %13 {strides = array<i32>} : memref<16x128xf32, #tpu.memory_space<vmem>>, vector<16x128xf32>,
    return
  }
  func.func @transform_0(%arg0: i32) -> (i32, i32) {
    %c0_i32 = arith.constant 0 : i32
    %c0_i32_0 = arith.constant 0 : i32
    return %arg0, %c0_i32 : i32, i32
  }
  func.func @transform_1(%arg0: i32) -> (i32, i32) {
    %c0_i32 = arith.constant 0 : i32
    %c0_i32_0 = arith.constant 0 : i32
    %c0_i32_1 = arith.constant 0 : i32
    return %c0_i32, %c0_i32_0 : i32, i32
  }
  func.func @transform_2(%arg0: i32) -> (i32, i32) {
    %c0_i32 = arith.constant 0 : i32
    %c0_i32_0 = arith.constant 0 : i32
    %c0_i32_1 = arith.constant 0 : i32
    return %c0_i32, %c0_i32_0 : i32, i32
  }
  func.func @transform_3(%arg0: i32) -> (i32, i32) {
    %c0_i32 = arith.constant 0 : i32
    %c0_i32_0 = arith.constant 0 : i32
    return %arg0, %c0_i32 : i32, i32
  }
}

</mosaic_0001>

<llo_original>
// kernel: tpu_custom_call.1
$region0: #{tpu_custom_call.1}
  #allocation0 [shape = 'u32[]', space=smem, size = 0x4, offset = 0x4, fixed_abs, tag = 'smem constant byte address 0x4 - core index']
  #allocation1 [shape = 'u32[144,128]{1,0:T(1,128)}', space=vmem, size = 0x12000, scoped, tag = 'internal scratch']
  %s0 = inlined_call_operand.hbm [shape: f32[16,32], index: 0, kind: input, shape index: {}]
  %s1 = inlined_call_operand.hbm [shape: f32[32,128], index: 1, kind: input, shape index: {}]
  %s2 = inlined_call_operand.vmem [shape: f32[1,128], index: 2, kind: input, shape index: {}]
  %s3 = inlined_call_operand.hbm [shape: f32[16,128], index: 3, kind: output, shape index: {}]
  %s4 = sld [smem:[#allocation0]]
  $region30: #{tpu_custom_call.1} parent=0
    _
  %s6 = ssub.s32 1, %s4
  %s7 = scalar_select 0, %s6, %s4
  $region1: #{tpu_custom_call.1} parent=0
    #allocation2 [shape = 'u8[8192]{0}', space=vmem, size = 0x2000, scoped, tag = 'input window, operand 0, single buffered']
    #allocation3 [shape = 's32[1]{0}', space=sflag, size = 0x4, scoped, tag = 'scoped memory for tpu_custom_call.1']
    #allocation4 [shape = 's32[1]{0}', space=sflag, size = 0x4, scoped, tag = 'scoped memory for tpu_custom_call.1']
    #allocation5 [shape = 'u8[16384]{0}', space=vmem, size = 0x4000, scoped, tag = 'input window, operand 1, single buffered']
    #allocation6 [shape = 's32[1]{0}', space=sflag, size = 0x4, scoped, tag = 'scoped memory for tpu_custom_call.1']
    #allocation7 [shape = 'u8[8192]{0}', space=vmem, size = 0x2000, scoped, tag = 'output window, operand 0, single buffered']
    %8 = vsyncpa [#allocation3], 0
    %9 = vsyncpa [#allocation6], 0
    %10 = vsyncpa [#allocation4], 0
    // Predicated region
    $region2: #{tpu_custom_call.1} parent=1 // pred_check
      _
    $region3: #{tpu_custom_call.1} parent=1 // pred_check_branch
      %12 = sbr.rel (0) target = $region5
    $region4: #{tpu_custom_call.1} parent=1 // pred_region
      %s14 = ssub.s32 256, 256
      %15 = vsyncadd [#allocation3], %s14
      %s16 = sshll.u32 [#allocation2], 4
      %s17 = int_to_ptr.vmem [resolvable:$true] %s16
      %22 = dma.hbm_to_vmem [thread:$0]  %s0, 256, %s17, [#allocation3], 128, 128, 8
    $region5: #{tpu_custom_call.1} parent=1 // pred_fallthru
      _
    // Predicated region
    $region6: #{tpu_custom_call.1} parent=1 // pred_check
      _
    $region7: #{tpu_custom_call.1} parent=1 // pred_check_branch
      %24 = sbr.rel (0) target = $region9
    $region8: #{tpu_custom_call.1} parent=1 // pred_region
      %s26 = ssub.s32 512, 512
      %27 = vsyncadd [#allocation6], %s26
      %s28 = sshll.u32 [#allocation5], 4
      %s29 = int_to_ptr.vmem [resolvable:$true] %s28
      %34 = dma.hbm_to_vmem [thread:$0]  %s1, 512, %s29, [#allocation6], 128, 128, 8
    $region9: #{tpu_custom_call.1} parent=1 // pred_fallthru
      _
    // Predicated region
    $region10: #{tpu_custom_call.1} parent=1 // pred_check
      _
    $region11: #{tpu_custom_call.1} parent=1 // pred_check_branch
      %36 = sbr.rel (0) target = $region13
    $region12: #{tpu_custom_call.1} parent=1 // pred_region
      _
    $region13: #{tpu_custom_call.1} parent=1 // pred_fallthru
      _
    // Predicated region
    $region14: #{tpu_custom_call.1} parent=1 // pred_check
      _
    $region15: #{tpu_custom_call.1} parent=1 // pred_check_branch
      %38 = sbr.rel (0) target = $region17
    $region16: #{tpu_custom_call.1} parent=1 // pred_region
      %39 = dma.done [#allocation3], 256
    $region17: #{tpu_custom_call.1} parent=1 // pred_fallthru
      _
    // Predicated region
    $region18: #{tpu_custom_call.1} parent=1 // pred_check
      _
    $region19: #{tpu_custom_call.1} parent=1 // pred_check_branch
      %41 = sbr.rel (0) target = $region21
    $region20: #{tpu_custom_call.1} parent=1 // pred_region
      %42 = dma.done [#allocation6], 512
    $region21: #{tpu_custom_call.1} parent=1 // pred_fallthru
      _
    %v43 = vld [vmem:[#allocation2] sm:$0xff]
    %v44 = vld [vmem:[#allocation2 + $0x8] sm:$0xff]
    %v45 = vld [vmem:[#allocation5] sm:$0xff]
    %v46 = vld [vmem:[#allocation5 + $0x8] sm:$0xff]
    %v47 = vld [vmem:[#allocation5 + $0x10] sm:$0xff]
    %v48 = vld [vmem:[#allocation5 + $0x18] sm:$0xff]
    %vm49 = vcmask 261120
    %v51 = vsel %vm49, %v43, 0
    %v54 = vsel %vm49, %v44, 0
    %56 = vmatprep.subr.mxu0 0.0
    %57 = vmatpush1.msra.mxu0 %v45
    %58 = vmatprep.subr.mxu0 0.0
    %59 = vmatpush1.msra.mxu0 %v46
    %60 = vmatprep.subr.mxu0 0.0
    %61 = vmatpush1.msra.mxu0 %v47
    %62 = vmatprep.subr.mxu0 0.0
    %63 = vmatpush1.msra.mxu0 %v48
    %64 = vmatprep.subr.mxu0 0.0
    %65 = vmatpush1.msra.mxu0 0.0
    %66 = vmatprep.subr.mxu0 0.0
    %67 = vmatpush1.msra.mxu0 0.0
    %68 = vmatprep.subr.mxu0 0.0
    %69 = vmatpush1.msra.mxu0 0.0
    %70 = vmatprep.subr.mxu0 0.0
    %71 = vmatpush1.msra.mxu0 0.0
    %72 = vmatprep.subr.mxu0 0.0
    %73 = vmatpush1.msra.mxu0 0.0
    %74 = vmatprep.subr.mxu0 0.0
    %75 = vmatpush1.msra.mxu0 0.0
    %76 = vmatprep.subr.mxu0 0.0
    %77 = vmatpush1.msra.mxu0 0.0
    %78 = vmatprep.subr.mxu0 0.0
    %79 = vmatpush1.msra.mxu0 0.0
    %80 = vmatprep.subr.mxu0 0.0
    %81 = vmatpush1.msra.mxu0 0.0
    %82 = vmatprep.subr.mxu0 0.0
    %83 = vmatpush1.msra.mxu0 0.0
    %84 = vmatprep.subr.mxu0 0.0
    %85 = vmatpush1.msra.mxu0 0.0
    %86 = vmatprep.subr.mxu0 0.0
    %87 = vmatpush1.msra.mxu0 0.0
    %88 = vmatprep.subr.mxu0 0.0
    %89 = vmatpush1.msra.mxu0 0.0
    %90 = vmatprep.subr.mxu0 0.0
    %91 = vmatpush1.msra.mxu0 0.0
    %92 = vmatprep.subr.mxu0 0.0
    %93 = vmatpush1.msra.mxu0 0.0
    %94 = vmatprep.subr.mxu0 0.0
    %95 = vmatpush1.msra.mxu0 0.0
    %96 = vmatprep.subr.mxu0 0.0
    %97 = vmatpush1.msra.mxu0 0.0
    %98 = vmatprep.subr.mxu0 0.0
    %99 = vmatpush1.msra.mxu0 0.0
    %100 = vmatprep.subr.mxu0 0.0
    %101 = vmatpush1.msra.mxu0 0.0
    %102 = vmatprep.subr.mxu0 0.0
    %103 = vmatpush1.msra.mxu0 0.0
    %104 = vmatprep.subr.mxu0 0.0
    %105 = vmatpush1.msra.mxu0 0.0
    %106 = vmatprep.subr.mxu0 0.0
    %107 = vmatpush1.msra.mxu0 0.0
    %108 = vmatprep.subr.mxu0 0.0
    %109 = vmatpush1.msra.mxu0 0.0
    %110 = vmatprep.subr.mxu0 0.0
    %111 = vmatpush1.msra.mxu0 0.0
    %112 = vmatprep.subr.mxu0 0.0
    %113 = vmatpush1.msra.mxu0 0.0
    %114 = vmatprep.subr.mxu0 0.0
    %115 = vmatpush1.msra.mxu0 0.0
    %116 = vmatprep.subr.mxu0 0.0
    %117 = vmatpush1.msra.mxu0 0.0
    %118 = vmatprep.subr.mxu0 0.0
    %119 = vmatpush1.msra.mxu0 0.0
    %120 = vmatprep.mubr.f32.mxu0 0.0
    %121 = vmatmul.mubr.f32.gmra.mrb[0].mxu0 %v51
    %v122 = vpop.f32.mrb[0].mxu0
    %v123 = vadd.f32 0.0, %v122
    %v124 = vpop.f32.mrb[0].mxu0
    %125 = vmatprep.mubr.f32.mxu0 0.0
    %126 = vmatmul.mubr.f32.gmra.mrb[0].mxu0 %v54
    %v127 = vpop.f32.mrb[0].mxu0
    %v128 = vadd.f32 0.0, %v127
    %v129 = vpop.f32.mrb[0].mxu0
    %130 = vdwg.mxu0
    %v131 = vld [vmem:[%s2] sm:$0x1]
    %v133 = vlaneseq
    %v134 = vshrl.u32 %v133, 7
    %v135 = vsub.s32 0, %v134
    %v136 = vrot.slane %v131, %v135
    %v138 = vsub.f32 %v123, %v136
    %v139 = vsub.f32 %v128, %v136
    %v140 = vmul.f32 %v138, %v138
    %v141 = vmul.f32 %v139, %v139
    %142 = vadd.xlane.f32.xlu0 %v140
    %v143 = vpop.xlane.xlu0 %142
    %144 = vadd.xlane.f32.xlu0 %v141
    %v145 = vpop.xlane.xlu0 %144
    %v146 = vmax.f32 %v143, 1e-24
    %v147 = vmax.f32 %v145, 1e-24
    %v148 = vrsqrt.pop %v146
    %v149 = vrsqrt.pop %v147
    %v150 = vmul.f32 %v138, %v148
    %v151 = vmul.f32 %v139, %v149
    %152 = vst [vmem:[#allocation7] sm:$0xff] %v150
    %153 = vst [vmem:[#allocation7 + $0x8] sm:$0xff] %v151
    // Predicated region
    $region22: #{tpu_custom_call.1} parent=1 // pred_check
      _
    $region23: #{tpu_custom_call.1} parent=1 // pred_check_branch
      %155 = sbr.rel (0) target = $region25
    $region24: #{tpu_custom_call.1} parent=1 // pred_region
      %s157 = ssub.s32 256, 256
      %158 = vsyncadd [#allocation4], %s157
      %s159 = sshll.u32 [#allocation7], 4
      %s160 = int_to_ptr.vmem [resolvable:$true] %s159
      %165 = dma.vmem_to_hbm [thread:$0]  %s160, 256, %s3, [#allocation4], 128, 128, 8
    $region25: #{tpu_custom_call.1} parent=1 // pred_fallthru
      _
    // Predicated region
    $region26: #{tpu_custom_call.1} parent=1 // pred_check
      _
    $region27: #{tpu_custom_call.1} parent=1 // pred_check_branch
      %167 = sbr.rel (0) target = $region29
    $region28: #{tpu_custom_call.1} parent=1 // pred_region
      %168 = dma.done [#allocation4], 256
    $region29: #{tpu_custom_call.1} parent=1 // pred_fallthru
      _
    %169 = vsyncpa [#allocation3], 1
    %170 = vsyncpa [#allocation6], 1
    %171 = vsyncpa [#allocation4], 1

</llo_original>
